<compile_context>
chip_gen: v7x
topology: tpu7x:2x2x1
jax: 0.10.0
libtpu: 0.0.40
codegen_flags: <defaults>
</compile_context>

<pallas_src>
import jax
import jax.numpy as jnp
from jax.experimental import pallas as pl
from jax.experimental.pallas import tpu as pltpu

_GRAY_R, _GRAY_G, _GRAY_B = 0.2989, 0.587, 0.114
_LANES = 128
_BLOCK_BUDGET_BYTES = 1 << 20  # ~1 MiB of input per grid step


def _grayscale(r, g, b):
    return _GRAY_R * r + _GRAY_G * g + _GRAY_B * b


def _blend(c, other, ratio):
    # torchvision _blend for float images (bound = 1.0)
    return jnp.clip(ratio * c + (1.0 - ratio) * other, 0.0, 1.0)


def _adjust_hue(r, g, b, hue_factor):
    """Elementwise RGB->HSV, hue shift, HSV->RGB (torchvision formulas)."""
    maxc = jnp.maximum(jnp.maximum(r, g), b)
    minc = jnp.minimum(jnp.minimum(r, g), b)
    eqc = maxc == minc
    cr = maxc - minc
    ones = jnp.ones_like(maxc)
    # Divides -> approximate reciprocals on the EUP slot (frees the VALU slot).
    # Where eqc the numerators are exactly zero, so the approximation is exact.
    inv_maxc = pl.reciprocal(jnp.where(eqc, ones, maxc), approx=True)
    inv_cr = pl.reciprocal(jnp.where(eqc, ones, cr), approx=True)
    s = cr * inv_maxc
    rc = (maxc - r) * inv_cr
    gc = (maxc - g) * inv_cr
    bc = (maxc - b) * inv_cr
    hr = jnp.where(maxc == r, bc - gc, 0.0)
    hg = jnp.where((maxc == g) & (maxc != r), 2.0 + rc - bc, 0.0)
    hb = jnp.where((maxc != g) & (maxc != r), 4.0 + gc - rc, 0.0)
    h = jnp.mod((hr + hg + hb) / 6.0 + 1.0, 1.0)
    v = maxc

    # hue shift
    h = jnp.mod(h + hue_factor, 1.0)

    # HSV -> RGB with float sector id (no int cast / integer modulo)
    h6 = h * 6.0
    i_f = jnp.floor(h6)
    f = h6 - i_f
    i_f = jnp.clip(i_f, 0.0, 5.0)
    p = jnp.clip(v * (1.0 - s), 0.0, 1.0)
    q = jnp.clip(v * (1.0 - s * f), 0.0, 1.0)
    t = jnp.clip(v * (1.0 - s * (1.0 - f)), 0.0, 1.0)

    c0 = i_f < 0.5
    c1 = i_f < 1.5
    c2 = i_f < 2.5
    c3 = i_f < 3.5
    c4 = i_f < 4.5
    r_o = jnp.where(c0, v, jnp.where(c1, q, jnp.where(c2, p,
          jnp.where(c3, p, jnp.where(c4, t, v)))))
    g_o = jnp.where(c0, t, jnp.where(c1, v, jnp.where(c2, v,
          jnp.where(c3, q, p))))
    b_o = jnp.where(c0, p, jnp.where(c1, p, jnp.where(c2, t,
          jnp.where(c3, v, jnp.where(c4, v, q)))))
    return r_o, g_o, b_o


def _make_kernel(fn_idx, brightness_factor, contrast_factor,
                 saturation_factor, hue_factor, n_valid_pixels, mean_axes):
    """Kernel over a block whose leading ref axis is the RGB channel.

    mean_axes: axes (of the per-channel slab) reduced for the per-image
    grayscale mean used by adjust_contrast.
    """
    inv_count = 1.0 / float(n_valid_pixels)

    def kernel(x_ref, o_ref):
        r = x_ref[0].astype(jnp.float32)
        g = x_ref[1].astype(jnp.float32)
        b = x_ref[2].astype(jnp.float32)
        for fn_id in fn_idx:  # static unroll, same order as forward()
            if fn_id == 0 and brightness_factor is not None:
                bf = float(brightness_factor)
                r = jnp.clip(bf * r, 0.0, 1.0)
                g = jnp.clip(bf * g, 0.0, 1.0)
                b = jnp.clip(bf * b, 0.0, 1.0)
            if fn_id == 1 and contrast_factor is not None:
                cf = float(contrast_factor)
                gray = _grayscale(r, g, b)
                # Padded lanes/rows are zero before the (first) contrast op,
                # so sum / true_pixel_count is the exact per-image mean.
                mean = jnp.sum(gray, axis=mean_axes, keepdims=True) * inv_count
                r = _blend(r, mean, cf)
                g = _blend(g, mean, cf)
                b = _blend(b, mean, cf)
            if fn_id == 2 and saturation_factor is not None:
                sf = float(saturation_factor)
                gray = _grayscale(r, g, b)
                r = _blend(r, gray, sf)
                g = _blend(g, gray, sf)
                b = _blend(b, gray, sf)
            if fn_id == 3 and hue_factor is not None:
                r, g, b = _adjust_hue(r, g, b, float(hue_factor))
        o_ref[0] = r.astype(o_ref.dtype)
        o_ref[1] = g.astype(o_ref.dtype)
        o_ref[2] = b.astype(o_ref.dtype)

    return kernel


def _vmem_limit(block_bytes):
    # in+out double-buffered plus elementwise temporaries; keep headroom,
    # cap below v7x physical VMEM (64 MiB).
    want = 6 * block_bytes + (8 << 20)
    return int(min(48 << 20, max(32 << 20, want)))


def color_jitter_ours_1(img, *, fn_idx, brightness_factor=None,
                        contrast_factor=None, saturation_factor=None,
                        hue_factor=None):
    """img: (N, 3, H, W) float values in [0, 1] -> same shape/dtype."""
    N, C, H, W = img.shape
    assert C == 3, "color jitter requires RGB input"
    fn_idx = tuple(int(i) for i in fn_idx)

    HW = H * W
    HWp = -(-HW // _LANES) * _LANES                    # lane-dense padded length
    itemsize = jnp.dtype(img.dtype).itemsize
    per_img_bytes = C * HWp * itemsize
    nb_fit = max(1, _BLOCK_BUDGET_BYTES // per_img_bytes)

    if N <= nb_fit or nb_fit >= 8:
        # ---- Layout A: (3, Np, HWp); batch on sublanes, spatial on lanes ----
        nb = N if N <= nb_fit else (nb_fit // 8) * 8   # == Np, or a multiple of 8
        np_pad = -(-N // nb) * nb
        x = jnp.transpose(img.reshape(N, C, HW), (1, 0, 2))
        x = jnp.pad(x, ((0, 0), (0, np_pad - N), (0, HWp - HW)))

        kernel = _make_kernel(fn_idx, brightness_factor, contrast_factor,
                              saturation_factor, hue_factor, HW, (-1,))
        block_bytes = C * nb * HWp * itemsize
        out = pl.pallas_call(
            kernel,
            out_shape=jax.ShapeDtypeStruct((C, np_pad, HWp), img.dtype),
            grid_spec=pltpu.PrefetchScalarGridSpec(
                num_scalar_prefetch=0,
                grid=(np_pad // nb,),
                in_specs=[pl.BlockSpec((C, nb, HWp), lambda n: (0, n, 0))],
                out_specs=pl.BlockSpec((C, nb, HWp), lambda n: (0, n, 0)),
            ),
            compiler_params=pltpu.CompilerParams(
                dimension_semantics=("parallel",),
                vmem_limit_bytes=_vmem_limit(block_bytes)),
        )(x)
        out = out[:, :N, :HW]
        return jnp.transpose(out, (1, 0, 2)).reshape(N, C, H, W)

    # ---- Layout B: (N, 3, S, 128); one (large) image per program ----
    S = HWp // _LANES
    x = jnp.pad(img.reshape(N, C, HW), ((0, 0), (0, 0), (0, HWp - HW)))
    x = x.reshape(N, C, S, _LANES)
    kernel = _make_kernel(fn_idx, brightness_factor, contrast_factor,
                          saturation_factor, hue_factor, HW, (-2, -1))
    block_bytes = C * S * _LANES * itemsize
    out = pl.pallas_call(
        kernel,
        out_shape=jax.ShapeDtypeStruct((N, C, S, _LANES), img.dtype),
        grid_spec=pltpu.PrefetchScalarGridSpec(
            num_scalar_prefetch=0,
            grid=(N,),
            in_specs=[pl.BlockSpec((pl.Squeezed(), C, S, _LANES),
                                   lambda n: (n, 0, 0, 0))],
            out_specs=pl.BlockSpec((pl.Squeezed(), C, S, _LANES),
                                   lambda n: (n, 0, 0, 0)),
        ),
        compiler_params=pltpu.CompilerParams(
            dimension_semantics=("parallel",),
            vmem_limit_bytes=_vmem_limit(block_bytes)),
    )(x)
    out = out.reshape(N, C, HWp)[:, :, :HW]
    return out.reshape(N, C, H, W)


if __name__ == "__main__":
    key = jax.random.PRNGKey(0)

    # Small NCHW batch in [0, 1] (exercises layout A: many small images/step).
    x = jax.random.uniform(key, (2, 3, 16, 16), dtype=jnp.float32)
    out = color_jitter_ours_1(
        x,
        fn_idx=(0, 1, 2, 3),          # brightness -> contrast -> saturation -> hue
        brightness_factor=1.2,
        contrast_factor=0.75,
        saturation_factor=1.3,
        hue_factor=0.1,
    )
    out = jax.block_until_ready(out)
    assert out.shape == x.shape and out.dtype == x.dtype
    assert bool(jnp.all(jnp.isfinite(out)))

    # Larger image path (exercises layout B: one image per program, squeezed batch).
    x2 = jax.random.uniform(jax.random.PRNGKey(0), (2, 3, 256, 256),
                            dtype=jnp.float32)
    out2 = color_jitter_ours_1(
        x2,
        fn_idx=(3, 2, 1, 0),
        brightness_factor=0.9,
        contrast_factor=1.1,
        saturation_factor=0.8,
        hue_factor=-0.05,
    )
    out2 = jax.block_until_ready(out2)
    assert out2.shape == x2.shape and out2.dtype == x2.dtype
    assert bool(jnp.all(jnp.isfinite(out2)))

    print("KERNEL_OK")
</pallas_src>

<mosaic_0001>
module attributes {stable_mosaic.version = 11 : i64} {
  func.func @kernel(%arg0: i32, %arg1: memref<3x2x256xf32, #tpu.memory_space<vmem>>, %arg2: memref<3x2x256xf32, #tpu.memory_space<vmem>>) attributes {dimension_semantics = [#tpu.dimension_semantics<parallel>], iteration_bounds = array<i64: 1>, scalar_prefetch = 0 : i64, scratch_operands = 0 : i64, tpu.core_type = #tpu.core_type<tc>, window_params = [{transform_indices = @transform_0, window_bounds = array<i64: 3, 2, 256>}, {transform_indices = @transform_1, window_bounds = array<i64: 3, 2, 256>}]} {
    %c0 = arith.constant 0 : index
    %c0_0 = arith.constant 0 : index
    %c0_1 = arith.constant 0 : index
    %0 = vector.load %arg1[%c0, %c0_0, %c0_1] : memref<3x2x256xf32, #tpu.memory_space<vmem>>, vector<1x2x256xf32>
    %1 = vector.shape_cast %0 : vector<1x2x256xf32> to vector<2x256xf32>
    %c1 = arith.constant 1 : index
    %c0_2 = arith.constant 0 : index
    %c0_3 = arith.constant 0 : index
    %2 = vector.load %arg1[%c1, %c0_2, %c0_3] : memref<3x2x256xf32, #tpu.memory_space<vmem>>, vector<1x2x256xf32>
    %3 = vector.shape_cast %2 : vector<1x2x256xf32> to vector<2x256xf32>
    %c2 = arith.constant 2 : index
    %c0_4 = arith.constant 0 : index
    %c0_5 = arith.constant 0 : index
    %4 = vector.load %arg1[%c2, %c0_4, %c0_5] : memref<3x2x256xf32, #tpu.memory_space<vmem>>, vector<1x2x256xf32>
    %5 = vector.shape_cast %4 : vector<1x2x256xf32> to vector<2x256xf32>
    %cst = arith.constant 1.200000e+00 : f32
    %6 = vector.broadcast %cst : f32 to vector<2x256xf32>
    %7 = arith.mulf %6, %1 : vector<2x256xf32>
    %cst_6 = arith.constant 0.000000e+00 : f32
    %cst_7 = arith.constant 1.000000e+00 : f32
    %8 = vector.broadcast %cst_6 : f32 to vector<2x256xf32>
    %9 = arith.maximumf %8, %7 : vector<2x256xf32>
    %10 = vector.broadcast %cst_7 : f32 to vector<2x256xf32>
    %11 = arith.minimumf %10, %9 : vector<2x256xf32>
    %cst_8 = arith.constant 1.200000e+00 : f32
    %12 = vector.broadcast %cst_8 : f32 to vector<2x256xf32>
    %13 = arith.mulf %12, %3 : vector<2x256xf32>
    %cst_9 = arith.constant 0.000000e+00 : f32
    %cst_10 = arith.constant 1.000000e+00 : f32
    %14 = vector.broadcast %cst_9 : f32 to vector<2x256xf32>
    %15 = arith.maximumf %14, %13 : vector<2x256xf32>
    %16 = vector.broadcast %cst_10 : f32 to vector<2x256xf32>
    %17 = arith.minimumf %16, %15 : vector<2x256xf32>
    %cst_11 = arith.constant 1.200000e+00 : f32
    %18 = vector.broadcast %cst_11 : f32 to vector<2x256xf32>
    %19 = arith.mulf %18, %5 : vector<2x256xf32>
    %cst_12 = arith.constant 0.000000e+00 : f32
    %cst_13 = arith.constant 1.000000e+00 : f32
    %20 = vector.broadcast %cst_12 : f32 to vector<2x256xf32>
    %21 = arith.maximumf %20, %19 : vector<2x256xf32>
    %22 = vector.broadcast %cst_13 : f32 to vector<2x256xf32>
    %23 = arith.minimumf %22, %21 : vector<2x256xf32>
    %cst_14 = arith.constant 2.989000e-01 : f32
    %24 = vector.broadcast %cst_14 : f32 to vector<2x256xf32>
    %25 = arith.mulf %24, %11 : vector<2x256xf32>
    %cst_15 = arith.constant 5.870000e-01 : f32
    %26 = vector.broadcast %cst_15 : f32 to vector<2x256xf32>
    %27 = arith.mulf %26, %17 : vector<2x256xf32>
    %28 = arith.addf %25, %27 : vector<2x256xf32>
    %cst_16 = arith.constant 1.140000e-01 : f32
    %29 = vector.broadcast %cst_16 : f32 to vector<2x256xf32>
    %30 = arith.mulf %29, %23 : vector<2x256xf32>
    %31 = arith.addf %28, %30 : vector<2x256xf32>
    %cst_17 = arith.constant dense<0.000000e+00> : vector<2xf32>
    %32 = vector.multi_reduction <add>, %31, %cst_17 [1] : vector<2x256xf32> to vector<2xf32>
    %33 = vector.shape_cast %32 : vector<2xf32> to vector<2x1xf32>
    %cst_18 = arith.constant 3.906250e-03 : f32
    %34 = vector.broadcast %cst_18 : f32 to vector<2x1xf32>
    %35 = arith.mulf %33, %34 : vector<2x1xf32>
    %cst_19 = arith.constant 7.500000e-01 : f32
    %36 = vector.broadcast %cst_19 : f32 to vector<2x256xf32>
    %37 = arith.mulf %36, %11 : vector<2x256xf32>
    %cst_20 = arith.constant 2.500000e-01 : f32
    %38 = vector.broadcast %cst_20 : f32 to vector<2x1xf32>
    %39 = arith.mulf %38, %35 : vector<2x1xf32>
    %40 = vector.broadcast %39 : vector<2x1xf32> to vector<2x256xf32>
    %41 = arith.addf %37, %40 : vector<2x256xf32>
    %cst_21 = arith.constant 0.000000e+00 : f32
    %cst_22 = arith.constant 1.000000e+00 : f32
    %42 = vector.broadcast %cst_21 : f32 to vector<2x256xf32>
    %43 = arith.maximumf %42, %41 : vector<2x256xf32>
    %44 = vector.broadcast %cst_22 : f32 to vector<2x256xf32>
    %45 = arith.minimumf %44, %43 : vector<2x256xf32>
    %cst_23 = arith.constant 7.500000e-01 : f32
    %46 = vector.broadcast %cst_23 : f32 to vector<2x256xf32>
    %47 = arith.mulf %46, %17 : vector<2x256xf32>
    %cst_24 = arith.constant 2.500000e-01 : f32
    %48 = vector.broadcast %cst_24 : f32 to vector<2x1xf32>
    %49 = arith.mulf %48, %35 : vector<2x1xf32>
    %50 = vector.broadcast %49 : vector<2x1xf32> to vector<2x256xf32>
    %51 = arith.addf %47, %50 : vector<2x256xf32>
    %cst_25 = arith.constant 0.000000e+00 : f32
    %cst_26 = arith.constant 1.000000e+00 : f32
    %52 = vector.broadcast %cst_25 : f32 to vector<2x256xf32>
    %53 = arith.maximumf %52, %51 : vector<2x256xf32>
    %54 = vector.broadcast %cst_26 : f32 to vector<2x256xf32>
    %55 = arith.minimumf %54, %53 : vector<2x256xf32>
    %cst_27 = arith.constant 7.500000e-01 : f32
    %56 = vector.broadcast %cst_27 : f32 to vector<2x256xf32>
    %57 = arith.mulf %56, %23 : vector<2x256xf32>
    %cst_28 = arith.constant 2.500000e-01 : f32
    %58 = vector.broadcast %cst_28 : f32 to vector<2x1xf32>
    %59 = arith.mulf %58, %35 : vector<2x1xf32>
    %60 = vector.broadcast %59 : vector<2x1xf32> to vector<2x256xf32>
    %61 = arith.addf %57, %60 : vector<2x256xf32>
    %cst_29 = arith.constant 0.000000e+00 : f32
    %cst_30 = arith.constant 1.000000e+00 : f32
    %62 = vector.broadcast %cst_29 : f32 to vector<2x256xf32>
    %63 = arith.maximumf %62, %61 : vector<2x256xf32>
    %64 = vector.broadcast %cst_30 : f32 to vector<2x256xf32>
    %65 = arith.minimumf %64, %63 : vector<2x256xf32>
    %cst_31 = arith.constant 2.989000e-01 : f32
    %66 = vector.broadcast %cst_31 : f32 to vector<2x256xf32>
    %67 = arith.mulf %66, %45 : vector<2x256xf32>
    %cst_32 = arith.constant 5.870000e-01 : f32
    %68 = vector.broadcast %cst_32 : f32 to vector<2x256xf32>
    %69 = arith.mulf %68, %55 : vector<2x256xf32>
    %70 = arith.addf %67, %69 : vector<2x256xf32>
    %cst_33 = arith.constant 1.140000e-01 : f32
    %71 = vector.broadcast %cst_33 : f32 to vector<2x256xf32>
    %72 = arith.mulf %71, %65 : vector<2x256xf32>
    %73 = arith.addf %70, %72 : vector<2x256xf32>
    %cst_34 = arith.constant 1.300000e+00 : f32
    %74 = vector.broadcast %cst_34 : f32 to vector<2x256xf32>
    %75 = arith.mulf %74, %45 : vector<2x256xf32>
    %cst_35 = arith.constant -3.000000e-01 : f32
    %76 = vector.broadcast %cst_35 : f32 to vector<2x256xf32>
    %77 = arith.mulf %76, %73 : vector<2x256xf32>
    %78 = arith.addf %75, %77 : vector<2x256xf32>
    %cst_36 = arith.constant 0.000000e+00 : f32
    %cst_37 = arith.constant 1.000000e+00 : f32
    %79 = vector.broadcast %cst_36 : f32 to vector<2x256xf32>
    %80 = arith.maximumf %79, %78 : vector<2x256xf32>
    %81 = vector.broadcast %cst_37 : f32 to vector<2x256xf32>
    %82 = arith.minimumf %81, %80 : vector<2x256xf32>
    %cst_38 = arith.constant 1.300000e+00 : f32
    %83 = vector.broadcast %cst_38 : f32 to vector<2x256xf32>
    %84 = arith.mulf %83, %55 : vector<2x256xf32>
    %cst_39 = arith.constant -3.000000e-01 : f32
    %85 = vector.broadcast %cst_39 : f32 to vector<2x256xf32>
    %86 = arith.mulf %85, %73 : vector<2x256xf32>
    %87 = arith.addf %84, %86 : vector<2x256xf32>
    %cst_40 = arith.constant 0.000000e+00 : f32
    %cst_41 = arith.constant 1.000000e+00 : f32
    %88 = vector.broadcast %cst_40 : f32 to vector<2x256xf32>
    %89 = arith.maximumf %88, %87 : vector<2x256xf32>
    %90 = vector.broadcast %cst_41 : f32 to vector<2x256xf32>
    %91 = arith.minimumf %90, %89 : vector<2x256xf32>
    %cst_42 = arith.constant 1.300000e+00 : f32
    %92 = vector.broadcast %cst_42 : f32 to vector<2x256xf32>
    %93 = arith.mulf %92, %65 : vector<2x256xf32>
    %cst_43 = arith.constant -3.000000e-01 : f32
    %94 = vector.broadcast %cst_43 : f32 to vector<2x256xf32>
    %95 = arith.mulf %94, %73 : vector<2x256xf32>
    %96 = arith.addf %93, %95 : vector<2x256xf32>
    %cst_44 = arith.constant 0.000000e+00 : f32
    %cst_45 = arith.constant 1.000000e+00 : f32
    %97 = vector.broadcast %cst_44 : f32 to vector<2x256xf32>
    %98 = arith.maximumf %97, %96 : vector<2x256xf32>
    %99 = vector.broadcast %cst_45 : f32 to vector<2x256xf32>
    %100 = arith.minimumf %99, %98 : vector<2x256xf32>
    %101 = arith.maximumf %82, %91 : vector<2x256xf32>
    %102 = arith.maximumf %101, %100 : vector<2x256xf32>
    %103 = arith.minimumf %82, %91 : vector<2x256xf32>
    %104 = arith.minimumf %103, %100 : vector<2x256xf32>
    %105 = arith.cmpf oeq, %102, %104 : vector<2x256xf32>
    %106 = arith.subf %102, %104 : vector<2x256xf32>
    %cst_46 = arith.constant 1.000000e+00 : f32
    %107 = vector.broadcast %cst_46 : f32 to vector<2x256xf32>
    %108 = arith.select %105, %107, %102 : vector<2x256xi1>, vector<2x256xf32>
    %109 = tpu.reciprocal %108 {approx = true} : vector<2x256xf32> -> vector<2x256xf32>
    %110 = arith.select %105, %107, %106 : vector<2x256xi1>, vector<2x256xf32>
    %111 = tpu.reciprocal %110 {approx = true} : vector<2x256xf32> -> vector<2x256xf32>
    %112 = arith.mulf %106, %109 : vector<2x256xf32>
    %113 = arith.subf %102, %82 : vector<2x256xf32>
    %114 = arith.mulf %113, %111 : vector<2x256xf32>
    %115 = arith.subf %102, %91 : vector<2x256xf32>
    %116 = arith.mulf %115, %111 : vector<2x256xf32>
    %117 = arith.subf %102, %100 : vector<2x256xf32>
    %118 = arith.mulf %117, %111 : vector<2x256xf32>
    %119 = arith.cmpf oeq, %102, %82 : vector<2x256xf32>
    %120 = arith.subf %118, %116 : vector<2x256xf32>
    %cst_47 = arith.constant 0.000000e+00 : f32
    %121 = vector.broadcast %cst_47 : f32 to vector<2x256xf32>
    %122 = arith.select %119, %120, %121 : vector<2x256xi1>, vector<2x256xf32>
    %123 = arith.cmpf oeq, %102, %91 : vector<2x256xf32>
    %124 = arith.cmpf one, %102, %82 : vector<2x256xf32>
    %125 = arith.andi %123, %124 : vector<2x256xi1>
    %cst_48 = arith.constant 2.000000e+00 : f32
    %126 = vector.broadcast %cst_48 : f32 to vector<2x256xf32>
    %127 = arith.addf %126, %114 : vector<2x256xf32>
    %128 = arith.subf %127, %118 : vector<2x256xf32>
    %cst_49 = arith.constant 0.000000e+00 : f32
    %129 = vector.broadcast %cst_49 : f32 to vector<2x256xf32>
    %130 = arith.select %125, %128, %129 : vector<2x256xi1>, vector<2x256xf32>
    %131 = arith.cmpf one, %102, %91 : vector<2x256xf32>
    %132 = arith.cmpf one, %102, %82 : vector<2x256xf32>
    %133 = arith.andi %131, %132 : vector<2x256xi1>
    %cst_50 = arith.constant 4.000000e+00 : f32
    %134 = vector.broadcast %cst_50 : f32 to vector<2x256xf32>
    %135 = arith.addf %134, %116 : vector<2x256xf32>
    %136 = arith.subf %135, %114 : vector<2x256xf32>
    %cst_51 = arith.constant 0.000000e+00 : f32
    %137 = vector.broadcast %cst_51 : f32 to vector<2x256xf32>
    %138 = arith.select %133, %136, %137 : vector<2x256xi1>, vector<2x256xf32>
    %139 = arith.addf %122, %130 : vector<2x256xf32>
    %140 = arith.addf %139, %138 : vector<2x256xf32>
    %cst_52 = arith.constant 6.000000e+00 : f32
    %141 = vector.broadcast %cst_52 : f32 to vector<2x256xf32>
    %142 = arith.divf %140, %141 : vector<2x256xf32>
    %cst_53 = arith.constant 1.000000e+00 : f32
    %143 = vector.broadcast %cst_53 : f32 to vector<2x256xf32>
    %144 = arith.addf %142, %143 : vector<2x256xf32>
    %cst_54 = arith.constant 1.000000e+00 : f32
    %145 = vector.broadcast %cst_54 : f32 to vector<2x256xf32>
    %146 = arith.remf %144, %145 : vector<2x256xf32>
    %cst_55 = arith.constant 0.000000e+00 : f32
    %147 = vector.broadcast %cst_55 : f32 to vector<2x256xf32>
    %148 = arith.cmpf one, %146, %147 : vector<2x256xf32>
    %cst_56 = arith.constant 0.000000e+00 : f32
    %149 = vector.broadcast %cst_56 : f32 to vector<2x256xf32>
    %150 = arith.cmpf olt, %146, %149 : vector<2x256xf32>
    %cst_57 = arith.constant 0.000000e+00 : f32
    %151 = arith.cmpf olt, %cst_54, %cst_57 : f32
    %152 = vector.broadcast %151 : i1 to vector<2x256xi1>
    %153 = vector.broadcast %152 : vector<2x256xi1> to vector<2x256xi1>
    %154 = arith.xori %150, %153 : vector<2x256xi1>
    %155 = arith.andi %154, %148 : vector<2x256xi1>
    %156 = vector.broadcast %cst_54 : f32 to vector<2x256xf32>
    %157 = arith.addf %146, %156 : vector<2x256xf32>
    %158 = arith.select %155, %157, %146 : vector<2x256xi1>, vector<2x256xf32>
    %cst_58 = arith.constant 1.000000e-01 : f32
    %159 = vector.broadcast %cst_58 : f32 to vector<2x256xf32>
    %160 = arith.addf %158, %159 : vector<2x256xf32>
    %cst_59 = arith.constant 1.000000e+00 : f32
    %161 = vector.broadcast %cst_59 : f32 to vector<2x256xf32>
    %162 = arith.remf %160, %161 : vector<2x256xf32>
    %cst_60 = arith.constant 0.000000e+00 : f32
    %163 = vector.broadcast %cst_60 : f32 to vector<2x256xf32>
    %164 = arith.cmpf one, %162, %163 : vector<2x256xf32>
    %cst_61 = arith.constant 0.000000e+00 : f32
    %165 = vector.broadcast %cst_61 : f32 to vector<2x256xf32>
    %166 = arith.cmpf olt, %162, %165 : vector<2x256xf32>
    %cst_62 = arith.constant 0.000000e+00 : f32
    %167 = arith.cmpf olt, %cst_59, %cst_62 : f32
    %168 = vector.broadcast %167 : i1 to vector<2x256xi1>
    %169 = vector.broadcast %168 : vector<2x256xi1> to vector<2x256xi1>
    %170 = arith.xori %166, %169 : vector<2x256xi1>
    %171 = arith.andi %170, %164 : vector<2x256xi1>
    %172 = vector.broadcast %cst_59 : f32 to vector<2x256xf32>
    %173 = arith.addf %162, %172 : vector<2x256xf32>
    %174 = arith.select %171, %173, %162 : vector<2x256xi1>, vector<2x256xf32>
    %cst_63 = arith.constant 6.000000e+00 : f32
    %175 = vector.broadcast %cst_63 : f32 to vector<2x256xf32>
    %176 = arith.mulf %174, %175 : vector<2x256xf32>
    %177 = math.floor %176 : vector<2x256xf32>
    %178 = arith.subf %176, %177 : vector<2x256xf32>
    %cst_64 = arith.constant 0.000000e+00 : f32
    %cst_65 = arith.constant 5.000000e+00 : f32
    %179 = vector.broadcast %cst_64 : f32 to vector<2x256xf32>
    %180 = arith.maximumf %179, %177 : vector<2x256xf32>
    %181 = vector.broadcast %cst_65 : f32 to vector<2x256xf32>
    %182 = arith.minimumf %181, %180 : vector<2x256xf32>
    %cst_66 = arith.constant 1.000000e+00 : f32
    %183 = vector.broadcast %cst_66 : f32 to vector<2x256xf32>
    %184 = arith.subf %183, %112 : vector<2x256xf32>
    %185 = arith.mulf %102, %184 : vector<2x256xf32>
    %cst_67 = arith.constant 0.000000e+00 : f32
    %cst_68 = arith.constant 1.000000e+00 : f32
    %186 = vector.broadcast %cst_67 : f32 to vector<2x256xf32>
    %187 = arith.maximumf %186, %185 : vector<2x256xf32>
    %188 = vector.broadcast %cst_68 : f32 to vector<2x256xf32>
    %189 = arith.minimumf %188, %187 : vector<2x256xf32>
    %190 = arith.mulf %112, %178 : vector<2x256xf32>
    %cst_69 = arith.constant 1.000000e+00 : f32
    %191 = vector.broadcast %cst_69 : f32 to vector<2x256xf32>
    %192 = arith.subf %191, %190 : vector<2x256xf32>
    %193 = arith.mulf %102, %192 : vector<2x256xf32>
    %cst_70 = arith.constant 0.000000e+00 : f32
    %cst_71 = arith.constant 1.000000e+00 : f32
    %194 = vector.broadcast %cst_70 : f32 to vector<2x256xf32>
    %195 = arith.maximumf %194, %193 : vector<2x256xf32>
    %196 = vector.broadcast %cst_71 : f32 to vector<2x256xf32>
    %197 = arith.minimumf %196, %195 : vector<2x256xf32>
    %cst_72 = arith.constant 1.000000e+00 : f32
    %198 = vector.broadcast %cst_72 : f32 to vector<2x256xf32>
    %199 = arith.subf %198, %178 : vector<2x256xf32>
    %200 = arith.mulf %112, %199 : vector<2x256xf32>
    %cst_73 = arith.constant 1.000000e+00 : f32
    %201 = vector.broadcast %cst_73 : f32 to vector<2x256xf32>
    %202 = arith.subf %201, %200 : vector<2x256xf32>
    %203 = arith.mulf %102, %202 : vector<2x256xf32>
    %cst_74 = arith.constant 0.000000e+00 : f32
    %cst_75 = arith.constant 1.000000e+00 : f32
    %204 = vector.broadcast %cst_74 : f32 to vector<2x256xf32>
    %205 = arith.maximumf %204, %203 : vector<2x256xf32>
    %206 = vector.broadcast %cst_75 : f32 to vector<2x256xf32>
    %207 = arith.minimumf %206, %205 : vector<2x256xf32>
    %cst_76 = arith.constant 5.000000e-01 : f32
    %208 = vector.broadcast %cst_76 : f32 to vector<2x256xf32>
    %209 = arith.cmpf olt, %182, %208 : vector<2x256xf32>
    %cst_77 = arith.constant 1.500000e+00 : f32
    %210 = vector.broadcast %cst_77 : f32 to vector<2x256xf32>
    %211 = arith.cmpf olt, %182, %210 : vector<2x256xf32>
    %cst_78 = arith.constant 2.500000e+00 : f32
    %212 = vector.broadcast %cst_78 : f32 to vector<2x256xf32>
    %213 = arith.cmpf olt, %182, %212 : vector<2x256xf32>
    %cst_79 = arith.constant 3.500000e+00 : f32
    %214 = vector.broadcast %cst_79 : f32 to vector<2x256xf32>
    %215 = arith.cmpf olt, %182, %214 : vector<2x256xf32>
    %cst_80 = arith.constant 4.500000e+00 : f32
    %216 = vector.broadcast %cst_80 : f32 to vector<2x256xf32>
    %217 = arith.cmpf olt, %182, %216 : vector<2x256xf32>
    %218 = arith.select %217, %207, %102 : vector<2x256xi1>, vector<2x256xf32>
    %219 = arith.select %215, %189, %218 : vector<2x256xi1>, vector<2x256xf32>
    %220 = arith.select %213, %189, %219 : vector<2x256xi1>, vector<2x256xf32>
    %221 = arith.select %211, %197, %220 : vector<2x256xi1>, vector<2x256xf32>
    %222 = arith.select %209, %102, %221 : vector<2x256xi1>, vector<2x256xf32>
    %223 = arith.select %215, %197, %189 : vector<2x256xi1>, vector<2x256xf32>
    %224 = arith.select %213, %102, %223 : vector<2x256xi1>, vector<2x256xf32>
    %225 = arith.select %211, %102, %224 : vector<2x256xi1>, vector<2x256xf32>
    %226 = arith.select %209, %207, %225 : vector<2x256xi1>, vector<2x256xf32>
    %227 = arith.select %217, %102, %197 : vector<2x256xi1>, vector<2x256xf32>
    %228 = arith.select %215, %102, %227 : vector<2x256xi1>, vector<2x256xf32>
    %229 = arith.select %213, %207, %228 : vector<2x256xi1>, vector<2x256xf32>
    %230 = arith.select %211, %189, %229 : vector<2x256xi1>, vector<2x256xf32>
    %231 = arith.select %209, %189, %230 : vector<2x256xi1>, vector<2x256xf32>
    %c0_81 = arith.constant 0 : index
    %c0_82 = arith.constant 0 : index
    %c0_83 = arith.constant 0 : index
    %232 = vector.load %arg2[%c0_81, %c0_82, %c0_83] : memref<3x2x256xf32, #tpu.memory_space<vmem>>, vector<1x2x256xf32>
    %233 = vector.shape_cast %232 : vector<1x2x256xf32> to vector<2x256xf32>
    %234 = vector.shape_cast %222 : vector<2x256xf32> to vector<1x2x256xf32>
    tpu.vector_store %arg2[%c0_81, %c0_82, %c0_83], %234 {strides = array<i32>} : memref<3x2x256xf32, #tpu.memory_space<vmem>>, vector<1x2x256xf32>,
    %c1_84 = arith.constant 1 : index
    %c0_85 = arith.constant 0 : index
    %c0_86 = arith.constant 0 : index
    %235 = vector.load %arg2[%c1_84, %c0_85, %c0_86] : memref<3x2x256xf32, #tpu.memory_space<vmem>>, vector<1x2x256xf32>
    %236 = vector.shape_cast %235 : vector<1x2x256xf32> to vector<2x256xf32>
    %237 = vector.shape_cast %226 : vector<2x256xf32> to vector<1x2x256xf32>
    tpu.vector_store %arg2[%c1_84, %c0_85, %c0_86], %237 {strides = array<i32>} : memref<3x2x256xf32, #tpu.memory_space<vmem>>, vector<1x2x256xf32>,
    %c2_87 = arith.constant 2 : index
    %c0_88 = arith.constant 0 : index
    %c0_89 = arith.constant 0 : index
    %238 = vector.load %arg2[%c2_87, %c0_88, %c0_89] : memref<3x2x256xf32, #tpu.memory_space<vmem>>, vector<1x2x256xf32>
    %239 = vector.shape_cast %238 : vector<1x2x256xf32> to vector<2x256xf32>
    %240 = vector.shape_cast %231 : vector<2x256xf32> to vector<1x2x256xf32>
    tpu.vector_store %arg2[%c2_87, %c0_88, %c0_89], %240 {strides = array<i32>} : memref<3x2x256xf32, #tpu.memory_space<vmem>>, vector<1x2x256xf32>,
    return
  }
  func.func @transform_0(%arg0: i32) -> (i32, i32, i32) {
    %c0_i32 = arith.constant 0 : i32
    %c0_i32_0 = arith.constant 0 : i32
    %c0_i32_1 = arith.constant 0 : i32
    return %c0_i32, %arg0, %c0_i32_0 : i32, i32, i32
  }
  func.func @transform_1(%arg0: i32) -> (i32, i32, i32) {
    %c0_i32 = arith.constant 0 : i32
    %c0_i32_0 = arith.constant 0 : i32
    %c0_i32_1 = arith.constant 0 : i32
    return %c0_i32, %arg0, %c0_i32_0 : i32, i32, i32
  }
}

</mosaic_0001>

<llo_original>
// kernel: tpu_custom_call.1
$region0: #{tpu_custom_call.1}
  #allocation0 [shape = 'u32[]', space=smem, size = 0x4, offset = 0x4, fixed_abs, tag = 'smem constant byte address 0x4 - core index']
  #allocation1 [shape = 'u32[144,128]{1,0:T(1,128)}', space=vmem, size = 0x12000, scoped, tag = 'internal scratch']
  %s0 = inlined_call_operand.hbm [shape: f32[3,2,256], index: 0, kind: input, shape index: {}]
  %s1 = inlined_call_operand.hbm [shape: f32[3,2,256], index: 1, kind: output, shape index: {}]
  %s2 = sld [smem:[#allocation0]]
  $region18: #{tpu_custom_call.1} parent=0
    _
  %s4 = ssub.s32 1, %s2
  %s5 = scalar_select 0, %s4, %s2
  $region1: #{tpu_custom_call.1} parent=0
    #allocation2 [shape = 'u8[6144]{0}', space=vmem, size = 0x1800, scoped, tag = 'input window, operand 0, single buffered']
    #allocation3 [shape = 's32[1]{0}', space=sflag, size = 0x4, scoped, tag = 'scoped memory for tpu_custom_call.1']
    #allocation4 [shape = 's32[1]{0}', space=sflag, size = 0x4, scoped, tag = 'scoped memory for tpu_custom_call.1']
    #allocation5 [shape = 'u8[6144]{0}', space=vmem, size = 0x1800, scoped, tag = 'output window, operand 0, single buffered']
    %6 = vsyncpa [#allocation3], 0
    %7 = vsyncpa [#allocation4], 0
    // Predicated region
    $region2: #{tpu_custom_call.1} parent=1 // pred_check
      _
    $region3: #{tpu_custom_call.1} parent=1 // pred_check_branch
      %9 = sbr.rel (0) target = $region5
    $region4: #{tpu_custom_call.1} parent=1 // pred_region
      %s11 = ssub.s32 192, 192
      %12 = vsyncadd [#allocation3], %s11
      %s13 = sshll.u32 [#allocation2], 4
      %s14 = int_to_ptr.vmem [resolvable:$true] %s13
      %19 = dma.hbm_to_vmem [thread:$0]  %s0, 192, %s14, [#allocation3], 64, 64, 4
    $region5: #{tpu_custom_call.1} parent=1 // pred_fallthru
      _
    // Predicated region
    $region6: #{tpu_custom_call.1} parent=1 // pred_check
      _
    $region7: #{tpu_custom_call.1} parent=1 // pred_check_branch
      %21 = sbr.rel (0) target = $region9
    $region8: #{tpu_custom_call.1} parent=1 // pred_region
      %22 = dma.done [#allocation3], 192
    $region9: #{tpu_custom_call.1} parent=1 // pred_fallthru
      _
    %v23 = vld [vmem:[#allocation2] sm:$0xf]
    %s24 = scalar_lea.vmem [#allocation2], 4
    %v25 = vld [vmem:[%s24] sm:$0xf]
    %s26 = scalar_lea.vmem [#allocation2], 8
    %v27 = vld [vmem:[%s26] sm:$0xf]
    %v28 = vmul.f32 %v23, 1.2
    %v29 = vmax.f32 %v28, 0.0
    %v30 = vmin.f32 %v29, 1.0
    %v31 = vmul.f32 %v25, 1.2
    %v32 = vmax.f32 %v31, 0.0
    %v33 = vmin.f32 %v32, 1.0
    %v34 = vmul.f32 %v27, 1.2
    %v35 = vmax.f32 %v34, 0.0
    %v36 = vmin.f32 %v35, 1.0
    %v37 = vmul.f32 %v30, 0.2989
    %v38 = vmul.f32 %v33, 0.587
    %v39 = vadd.f32 %v37, %v38
    %v40 = vmul.f32 %v36, 0.114
    %v41 = vadd.f32 %v39, %v40
    %v44 = vunpack.c.l.s4 1983009808
    %v45 = vunpack.c.0.s8 %v44
    %v46 = vlaneseq
    %v47 = vshrl.u32 %v46, 7
    %v48 = vsub.s32 %v45, %v47
    %v49 = vrot.slane %v41, %v48
    %v50 = vcombine.high %v49, %v49
    %vm53 = vcmask 1041408
    %v54 = vsel %vm53, %v49, 0.0
    %v55 = vsel %vm53, %v50, 0.0
    %v56 = vadd.f32 %v54, %v55
    %57 = vadd.xlane.f32.xlu0 %v56
    %v58 = vpop.xlane.xlu0 %57
    %v59 = vmul.f32 %v58, 0.00390625
    %v60 = vmul.f32 %v30, 0.75
    %v61 = vmul.f32 %v59, 0.25
    %v64 = vunpack.c.l.s4 269488144
    %v65 = vunpack.c.0.s8 %v64
    %v66 = vlaneseq
    %v67 = vshrl.u32 %v66, 7
    %v68 = vsub.s32 %v65, %v67
    %v69 = vrot.slane %v61, %v68
    %v71 = vadd.f32 %v60, %v69
    %v72 = vmax.f32 %v71, 0.0
    %v73 = vmin.f32 %v72, 1.0
    %v74 = vmul.f32 %v33, 0.75
    %v75 = vadd.f32 %v74, %v69
    %v76 = vmax.f32 %v75, 0.0
    %v77 = vmin.f32 %v76, 1.0
    %v78 = vmul.f32 %v36, 0.75
    %v79 = vadd.f32 %v78, %v69
    %v80 = vmax.f32 %v79, 0.0
    %v81 = vmin.f32 %v80, 1.0
    %v82 = vmul.f32 %v73, 0.2989
    %v83 = vmul.f32 %v77, 0.587
    %v84 = vadd.f32 %v82, %v83
    %v85 = vmul.f32 %v81, 0.114
    %v86 = vadd.f32 %v84, %v85
    %v87 = vmul.f32 %v73, 1.3
    %v88 = vmul.f32 %v86, -0.3
    %v89 = vadd.f32 %v87, %v88
    %v90 = vmax.f32 %v89, 0.0
    %v91 = vmin.f32 %v90, 1.0
    %v92 = vmul.f32 %v77, 1.3
    %v93 = vadd.f32 %v92, %v88
    %v94 = vmax.f32 %v93, 0.0
    %v95 = vmin.f32 %v94, 1.0
    %v96 = vmul.f32 %v81, 1.3
    %v97 = vadd.f32 %v96, %v88
    %v98 = vmax.f32 %v97, 0.0
    %v99 = vmin.f32 %v98, 1.0
    %v100 = vmax.f32 %v91, %v95
    %v101 = vmax.f32 %v100, %v99
    %v102 = vmin.f32 %v91, %v95
    %v103 = vmin.f32 %v102, %v99
    %vm104 = vcmp.eq.f32.partialorder %v101, %v103
    %v105 = vsub.f32 %v101, %v103
    %v106 = vsel %vm104, 1.0, %v101
    %v107 = vrcp.pop %v106
    %v108 = vsel %vm104, 1.0, %v105
    %v109 = vrcp.pop %v108
    %v110 = vmul.f32 %v105, %v107
    %v111 = vsub.f32 %v101, %v91
    %v112 = vmul.f32 %v111, %v109
    %v113 = vsub.f32 %v101, %v95
    %v114 = vmul.f32 %v113, %v109
    %v115 = vsub.f32 %v101, %v99
    %v116 = vmul.f32 %v115, %v109
    %vm117 = vcmp.eq.f32.partialorder %v101, %v91
    %v118 = vsub.f32 %v116, %v114
    %v119 = vsel %vm117, %v118, 0.0
    %vm120 = vcmp.eq.f32.partialorder %v101, %v95
    %vm121 = vcmp.ne.f32.partialorder %v101, %v91
    %vm122 = vmand %vm120, %vm121
    %v123 = vadd.f32 %v112, 2.0
    %v124 = vsub.f32 %v123, %v116
    %v125 = vsel %vm122, %v124, 0.0
    %vm126 = vcmp.ne.f32.partialorder %v101, %v95
    %vm127 = vmand %vm126, %vm121
    %v128 = vadd.f32 %v114, 4.0
    %v129 = vsub.f32 %v128, %v112
    %v130 = vsel %vm127, %v129, 0.0
    %v131 = vadd.f32 %v119, %v125
    %v132 = vadd.f32 %v131, %v130
    %v133 = vrcp.pop 6.0
    %v134 = vmul.f32 %v132, %v133
    %v135 = vadd.f32 %v134, 1.0
    %v136 = vand.u32 2147483647, %v135
    %v137 = vrcp.pop 1.0
    %v138 = vmul.f32 %v136, %v137
    %v139 = vfloor.f32 %v138
    %v140 = vsub.f32 %v136, %v139
    %vm141 = vcmp.eq.f32.partialorder %v140, 1.0
    %v142 = vsel %vm141, 0.0, %v140
    %v143 = vand.u32 2147483647, %v142
    %v144 = vand.u32 %v135, 2147483648
    %v145 = vor.u32 %v143, %v144
    %vm146 = vcmp.ne.f32.partialorder %v145, 0.0
    %vm147 = vcmp.lt.f32.partialorder %v145, 0.0
    %vm148 = vmand %vm147, %vm146
    %v149 = vadd.f32 %v145, 1.0
    %v150 = vsel %vm148, %v149, %v145
    %v151 = vadd.f32 %v150, 0.1
    %v152 = vand.u32 2147483647, %v151
    %v153 = vrcp.pop 1.0
    %v154 = vmul.f32 %v152, %v153
    %v155 = vfloor.f32 %v154
    %v156 = vsub.f32 %v152, %v155
    %vm157 = vcmp.eq.f32.partialorder %v156, 1.0
    %v158 = vsel %vm157, 0.0, %v156
    %v159 = vand.u32 2147483647, %v158
    %v160 = vand.u32 %v151, 2147483648
    %v161 = vor.u32 %v159, %v160
    %vm162 = vcmp.ne.f32.partialorder %v161, 0.0
    %vm163 = vcmp.lt.f32.partialorder %v161, 0.0
    %vm164 = vmand %vm163, %vm162
    %v165 = vadd.f32 %v161, 1.0
    %v166 = vsel %vm164, %v165, %v161
    %v167 = vmul.f32 %v166, 6.0
    %v168 = vfloor.f32 %v167
    %v169 = vsub.f32 %v167, %v168
    %v170 = vmax.f32 %v168, 0.0
    %v171 = vmin.f32 %v170, 5.0
    %v172 = vsub.f32 1.0, %v110
    %v173 = vmul.f32 %v101, %v172
    %v174 = vmax.f32 %v173, 0.0
    %v175 = vmin.f32 %v174, 1.0
    %v176 = vmul.f32 %v110, %v169
    %v177 = vsub.f32 1.0, %v176
    %v178 = vmul.f32 %v101, %v177
    %v179 = vmax.f32 %v178, 0.0
    %v180 = vmin.f32 %v179, 1.0
    %v181 = vsub.f32 1.0, %v169
    %v182 = vmul.f32 %v110, %v181
    %v183 = vsub.f32 1.0, %v182
    %v184 = vmul.f32 %v101, %v183
    %v185 = vmax.f32 %v184, 0.0
    %v186 = vmin.f32 %v185, 1.0
    %vm187 = vcmp.lt.f32.partialorder %v171, 0.5
    %vm188 = vcmp.lt.f32.partialorder %v171, 1.5
    %vm189 = vcmp.lt.f32.partialorder %v171, 2.5
    %vm190 = vcmp.lt.f32.partialorder %v171, 3.5
    %vm191 = vcmp.lt.f32.partialorder %v171, 4.5
    %v192 = vsel %vm191, %v186, %v101
    %v193 = vsel %vm190, %v175, %v192
    %v194 = vsel %vm189, %v175, %v193
    %v195 = vsel %vm188, %v180, %v194
    %v196 = vsel %vm187, %v101, %v195
    %v197 = vsel %vm190, %v180, %v175
    %v198 = vsel %vm189, %v101, %v197
    %v199 = vsel %vm188, %v101, %v198
    %v200 = vsel %vm187, %v186, %v199
    %v201 = vsel %vm191, %v101, %v180
    %v202 = vsel %vm190, %v101, %v201
    %v203 = vsel %vm189, %v186, %v202
    %v204 = vsel %vm188, %v175, %v203
    %v205 = vsel %vm187, %v175, %v204
    %206 = vst [vmem:[#allocation5] sm:$0xf] %v196
    %s207 = scalar_lea.vmem [#allocation5], 4
    %208 = vst [vmem:[%s207] sm:$0xf] %v200
    %s209 = scalar_lea.vmem [#allocation5], 8
    %210 = vst [vmem:[%s209] sm:$0xf] %v205
    // Predicated region
    $region10: #{tpu_custom_call.1} parent=1 // pred_check
      _
    $region11: #{tpu_custom_call.1} parent=1 // pred_check_branch
      %212 = sbr.rel (0) target = $region13
    $region12: #{tpu_custom_call.1} parent=1 // pred_region
      %s214 = ssub.s32 192, 192
      %215 = vsyncadd [#allocation4], %s214
      %s216 = sshll.u32 [#allocation5], 4
      %s217 = int_to_ptr.vmem [resolvable:$true] %s216
      %222 = dma.vmem_to_hbm [thread:$0]  %s217, 192, %s1, [#allocation4], 64, 64, 4
    $region13: #{tpu_custom_call.1} parent=1 // pred_fallthru
      _
    // Predicated region
    $region14: #{tpu_custom_call.1} parent=1 // pred_check
      _
    $region15: #{tpu_custom_call.1} parent=1 // pred_check_branch
      %224 = sbr.rel (0) target = $region17
    $region16: #{tpu_custom_call.1} parent=1 // pred_region
      %225 = dma.done [#allocation4], 192
    $region17: #{tpu_custom_call.1} parent=1 // pred_fallthru
      _
    %226 = vsyncpa [#allocation3], 1
    %227 = vsyncpa [#allocation4], 1

</llo_original>
